<compile_context>
chip_gen: v7x
topology: tpu7x:2x2x1
jax: 0.10.0
libtpu: 0.0.40
codegen_flags: <defaults>
</compile_context>

<pallas_src>
import functools
import math

import jax
import jax.numpy as jnp
from jax import lax
from jax.experimental import pallas as pl
from jax.experimental.pallas import tpu as pltpu

_INV_SQRT2 = 1.0 / math.sqrt(2.0)
_SQRT_2_OVER_PI = math.sqrt(2.0 / math.pi)


def _gelu_f32(h, *, approximate):
    if approximate:
        # tanh formulation -> EUP slot (co-issued with VALU/MXU); slight
        # numeric deviation from torch's exact erf-GELU.
        inner = _SQRT_2_OVER_PI * (h + 0.044715 * h * h * h)
        return 0.5 * h * (1.0 + jnp.tanh(inner))
    # exact: x * 0.5 * (1 + erf(x / sqrt(2)))  (matches the PyTorch module)
    return h * (0.5 * (1.0 + lax.erf(h * _INV_SQRT2)))


def _bert_intermediate_kernel(x_ref, w_ref, b_ref, o_ref, *, compute_dtype,
                              approximate_gelu):
    # x_ref: (tm, H), w_ref: (H, tn), b_ref: (1, tn) f32, o_ref: (tm, tn)
    x = x_ref[...]
    if x.dtype != compute_dtype:
        x = x.astype(compute_dtype)          # in-kernel cast: no extra HBM pass
    h = jnp.dot(x, w_ref[...], preferred_element_type=jnp.float32)
    h = h + b_ref[...]                       # bias + activation in f32
    o_ref[...] = _gelu_f32(h, approximate=approximate_gelu).astype(o_ref.dtype)


def _clamp_tile(t, full, mult):
    if t >= full:
        return full
    return max(mult, (t // mult) * mult)


def prepare_params(weight, bias, *, compute_dtype=jnp.bfloat16):
    """Do ONCE at parameter-load time.

    weight: torch nn.Linear layout (I, H)  ->  (H, I) in compute_dtype.
    bias:   (I,)                            ->  f32.
    Avoids re-casting the weight on every forward call.
    """
    return (jnp.asarray(weight).T.astype(compute_dtype),
            jnp.asarray(bias, dtype=jnp.float32))


def bert_intermediate(hidden_states, weight_t, bias, *, tm=512, tn=2048,
                      compute_dtype=jnp.bfloat16, out_dtype=None,
                      approximate_gelu=False,
                      vmem_budget_bytes=48 * 1024 * 1024):
    """hidden_states: (B, S, H); weight_t: (H, I) (== torch weight.T); bias: (I,)."""
    B, S, H = hidden_states.shape
    I = weight_t.shape[1]
    M = B * S
    out_dtype = out_dtype or hidden_states.dtype

    x2d = hidden_states.reshape(M, H)
    if weight_t.dtype != compute_dtype:
        # Fallback convenience only; prefer prepare_params() at load time.
        weight_t = weight_t.astype(compute_dtype)
    b2d = bias.reshape(1, I).astype(jnp.float32)

    x_item = x2d.dtype.itemsize
    w_item = weight_t.dtype.itemsize
    o_item = jnp.dtype(out_dtype).itemsize

    m_mult = 16 if x_item == 2 else 8
    tm = _clamp_tile(tm, M, m_mult)

    def _footprint(tm_, tn_):
        # Conservative double-buffered VMEM working set.
        return (2 * tm_ * H * x_item        # x tile
                + 2 * H * tn_ * w_item      # weight slab
                + 2 * tn_ * 4               # bias
                + 2 * tm_ * tn_ * o_item)   # out tile

    weight_resident = _footprint(tm, I) <= vmem_budget_bytes

    if weight_resident:
        # 1-D grid over tokens; weight + bias resident (fetched once).
        grid = (pl.cdiv(M, tm),)
        in_specs = [
            pl.BlockSpec((tm, H), lambda i: (i, 0)),
            pl.BlockSpec((H, I), lambda i: (0, 0)),
            pl.BlockSpec((1, I), lambda i: (0, 0)),
        ]
        out_specs = pl.BlockSpec((tm, I), lambda i: (i, 0))
        dim_sem = ("parallel",)
        needed = _footprint(tm, I)
        bytes_accessed = (M * H * x_item + H * I * w_item + I * 4
                          + M * I * o_item)
    else:
        # v7x-style fallback: tile I, but order the grid (I outer, M inner) so
        # each big (H, tn) weight slab is streamed exactly once; only the
        # small (tm, H) x tile is re-fetched (I/tn times).
        tn = _clamp_tile(tn, I, 128)
        n_i = pl.cdiv(I, tn)
        grid = (n_i, pl.cdiv(M, tm))
        in_specs = [
            pl.BlockSpec((tm, H), lambda j, i: (i, 0)),
            pl.BlockSpec((H, tn), lambda j, i: (0, j)),
            pl.BlockSpec((1, tn), lambda j, i: (0, j)),
        ]
        out_specs = pl.BlockSpec((tm, tn), lambda j, i: (i, j))
        dim_sem = ("parallel", "parallel")
        needed = _footprint(tm, tn)
        bytes_accessed = (n_i * M * H * x_item + H * I * w_item + I * 4
                          + M * I * o_item)

    # Explicit VMEM limit sized from the actual working set (+25% headroom),
    # capped at 64 MiB so it is valid on every chip (v7x per-TC physical).
    vmem_limit = min(max(int(needed * 1.25), 32 * 1024 * 1024),
                     64 * 1024 * 1024)

    kernel = functools.partial(_bert_intermediate_kernel,
                               compute_dtype=compute_dtype,
                               approximate_gelu=approximate_gelu)

    cost = pl.CostEstimate(flops=2 * M * H * I,
                           transcendentals=M * I,
                           bytes_accessed=bytes_accessed)

    out2d = pl.pallas_call(
        kernel,
        out_shape=jax.ShapeDtypeStruct((M, I), out_dtype),
        grid_spec=pltpu.PrefetchScalarGridSpec(
            num_scalar_prefetch=0,
            grid=grid,
            in_specs=in_specs,
            out_specs=out_specs,
        ),
        compiler_params=pltpu.CompilerParams(
            dimension_semantics=dim_sem,
            vmem_limit_bytes=vmem_limit,
        ),
        cost_estimate=cost,
    )(x2d, weight_t, b2d)

    return out2d.reshape(B, S, I)


def reference(hidden_states, weight_t, bias):
    h = jnp.einsum("bsh,hi->bsi",
                   hidden_states.astype(jnp.float32),
                   weight_t.astype(jnp.float32)) + bias
    return h * 0.5 * (1.0 + lax.erf(h / jnp.sqrt(2.0)))


if __name__ == "__main__":
    # Small config consistent with BertIntermediate: hidden_size=32,
    # intermediate_size=128, batch=2, seq=8.
    B, S, H, I = 2, 8, 32, 128

    key = jax.random.PRNGKey(0)
    kx, kw, kb = jax.random.split(key, 3)

    hidden_states = jax.random.normal(kx, (B, S, H), dtype=jnp.float32)
    # torch nn.Linear layout: weight (I, H), bias (I,)
    weight = jax.random.normal(kw, (I, H), dtype=jnp.float32) * 0.02
    bias = jax.random.normal(kb, (I,), dtype=jnp.float32) * 0.02

    ref = reference(hidden_states, weight.T, bias)

    # Full-precision path: exact erf-GELU, matches the reference tightly.
    out_f32 = jax.block_until_ready(
        bert_intermediate(hidden_states, weight.T, bias,
                          compute_dtype=jnp.float32))
    assert out_f32.shape == (B, S, I), out_f32.shape
    assert jnp.allclose(out_f32, ref, atol=1e-5, rtol=1e-5), \
        float(jnp.max(jnp.abs(out_f32 - ref)))

    # Performance path: weight pre-cast once to bf16 (prepare_params), x cast
    # to bf16 inside the kernel, f32 accumulate + f32 erf-GELU epilogue.
    w_t_bf16, b_f32 = prepare_params(weight, bias)
    out_bf16 = jax.block_until_ready(
        bert_intermediate(hidden_states, w_t_bf16, b_f32))
    assert out_bf16.shape == (B, S, I), out_bf16.shape
    assert jnp.allclose(out_bf16, ref, atol=2e-2, rtol=2e-2), \
        float(jnp.max(jnp.abs(out_bf16 - ref)))

    print("KERNEL_OK")
</pallas_src>

<mosaic_0001>
module attributes {stable_mosaic.version = 11 : i64} {
  func.func @_bert_intermediate_kernel(%arg0: i32, %arg1: memref<16x32xf32, #tpu.memory_space<vmem>>, %arg2: memref<32x128xf32, #tpu.memory_space<vmem>>, %arg3: memref<1x128xf32, #tpu.memory_space<vmem>>, %arg4: memref<16x128xf32, #tpu.memory_space<vmem>>) attributes {dimension_semantics = [#tpu.dimension_semantics<parallel>], iteration_bounds = array<i64: 1>, scalar_prefetch = 0 : i64, scratch_operands = 0 : i64, tpu.core_type = #tpu.core_type<tc>, window_params = [{transform_indices = @transform_0, window_bounds = array<i64: 16, 32>}, {pipeline_mode = #tpu.pipeline_mode<synchronous>, transform_indices = @transform_1, window_bounds = array<i64: 32, 128>}, {pipeline_mode = #tpu.pipeline_mode<synchronous>, transform_indices = @transform_2, window_bounds = array<i64: 1, 128>}, {transform_indices = @transform_3, window_bounds = array<i64: 16, 128>}]} {
    %c0 = arith.constant 0 : index
    %c0_0 = arith.constant 0 : index
    %0 = vector.load %arg1[%c0, %c0_0] : memref<16x32xf32, #tpu.memory_space<vmem>>, vector<16x32xf32>
    %c0_1 = arith.constant 0 : index
    %c0_2 = arith.constant 0 : index
    %1 = vector.load %arg2[%c0_1, %c0_2] : memref<32x128xf32, #tpu.memory_space<vmem>>, vector<32x128xf32>
    %cst = arith.constant dense<0.000000e+00> : vector<16x128xf32>
    %2 = tpu.matmul %0, %1, %cst {dimension_numbers = #tpu.dot_dimension_numbers<[1], [0], [0], [1], [0, 0, 1, 1], [], []>} : vector<16x32xf32>, vector<32x128xf32>, vector<16x128xf32> -> vector<16x128xf32>
    %c0_3 = arith.constant 0 : index
    %c0_4 = arith.constant 0 : index
    %3 = vector.load %arg3[%c0_3, %c0_4] : memref<1x128xf32, #tpu.memory_space<vmem>>, vector<1x128xf32>
    %4 = vector.broadcast %3 : vector<1x128xf32> to vector<16x128xf32>
    %5 = arith.addf %2, %4 : vector<16x128xf32>
    %cst_5 = arith.constant 0.707106769 : f32
    %6 = vector.broadcast %cst_5 : f32 to vector<16x128xf32>
    %7 = arith.mulf %5, %6 : vector<16x128xf32>
    %8 = math.erf %7 : vector<16x128xf32>
    %cst_6 = arith.constant 1.000000e+00 : f32
    %9 = vector.broadcast %cst_6 : f32 to vector<16x128xf32>
    %10 = arith.addf %9, %8 : vector<16x128xf32>
    %cst_7 = arith.constant 5.000000e-01 : f32
    %11 = vector.broadcast %cst_7 : f32 to vector<16x128xf32>
    %12 = arith.mulf %11, %10 : vector<16x128xf32>
    %13 = arith.mulf %5, %12 : vector<16x128xf32>
    %c0_8 = arith.constant 0 : index
    %c0_9 = arith.constant 0 : index
    %14 = vector.load %arg4[%c0_8, %c0_9] : memref<16x128xf32, #tpu.memory_space<vmem>>, vector<16x128xf32>
    tpu.vector_store %arg4[%c0_8, %c0_9], %13 {strides = array<i32>} : memref<16x128xf32, #tpu.memory_space<vmem>>, vector<16x128xf32>,
    return
  }
  func.func @transform_0(%arg0: i32) -> (i32, i32) {
    %c0_i32 = arith.constant 0 : i32
    %c0_i32_0 = arith.constant 0 : i32
    return %arg0, %c0_i32 : i32, i32
  }
  func.func @transform_1(%arg0: i32) -> (i32, i32) {
    %c0_i32 = arith.constant 0 : i32
    %c0_i32_0 = arith.constant 0 : i32
    %c0_i32_1 = arith.constant 0 : i32
    return %c0_i32, %c0_i32_0 : i32, i32
  }
  func.func @transform_2(%arg0: i32) -> (i32, i32) {
    %c0_i32 = arith.constant 0 : i32
    %c0_i32_0 = arith.constant 0 : i32
    %c0_i32_1 = arith.constant 0 : i32
    return %c0_i32, %c0_i32_0 : i32, i32
  }
  func.func @transform_3(%arg0: i32) -> (i32, i32) {
    %c0_i32 = arith.constant 0 : i32
    %c0_i32_0 = arith.constant 0 : i32
    return %arg0, %c0_i32 : i32, i32
  }
}

</mosaic_0001>

<llo_original>
// kernel: tpu_custom_call.1
$region0: #{tpu_custom_call.1}
  #allocation0 [shape = 'u32[]', space=smem, size = 0x4, offset = 0x4, fixed_abs, tag = 'smem constant byte address 0x4 - core index']
  #allocation1 [shape = 'u32[144,128]{1,0:T(1,128)}', space=vmem, size = 0x12000, scoped, tag = 'internal scratch']
  %s0 = inlined_call_operand.hbm [shape: f32[16,32], index: 0, kind: input, shape index: {}]
  %s1 = inlined_call_operand.hbm [shape: f32[32,128], index: 1, kind: input, shape index: {}]
  %s2 = inlined_call_operand.vmem [shape: f32[1,128], index: 2, kind: input, shape index: {}]
  %s3 = inlined_call_operand.hbm [shape: f32[16,128], index: 3, kind: output, shape index: {}]
  %s4 = sld [smem:[#allocation0]]
  $region30: #{tpu_custom_call.1} parent=0
    _
  %s6 = ssub.s32 1, %s4
  %s7 = scalar_select 0, %s6, %s4
  $region1: #{tpu_custom_call.1} parent=0
    #allocation2 [shape = 'u8[8192]{0}', space=vmem, size = 0x2000, scoped, tag = 'input window, operand 0, single buffered']
    #allocation3 [shape = 's32[1]{0}', space=sflag, size = 0x4, scoped, tag = 'scoped memory for tpu_custom_call.1']
    #allocation4 [shape = 's32[1]{0}', space=sflag, size = 0x4, scoped, tag = 'scoped memory for tpu_custom_call.1']
    #allocation5 [shape = 'u8[16384]{0}', space=vmem, size = 0x4000, scoped, tag = 'input window, operand 1, single buffered']
    #allocation6 [shape = 's32[1]{0}', space=sflag, size = 0x4, scoped, tag = 'scoped memory for tpu_custom_call.1']
    #allocation7 [shape = 'u8[8192]{0}', space=vmem, size = 0x2000, scoped, tag = 'output window, operand 0, single buffered']
    %8 = vsyncpa [#allocation3], 0
    %9 = vsyncpa [#allocation6], 0
    %10 = vsyncpa [#allocation4], 0
    // Predicated region
    $region2: #{tpu_custom_call.1} parent=1 // pred_check
      _
    $region3: #{tpu_custom_call.1} parent=1 // pred_check_branch
      %12 = sbr.rel (0) target = $region5
    $region4: #{tpu_custom_call.1} parent=1 // pred_region
      %s14 = ssub.s32 256, 256
      %15 = vsyncadd [#allocation3], %s14
      %s16 = sshll.u32 [#allocation2], 4
      %s17 = int_to_ptr.vmem [resolvable:$true] %s16
      %22 = dma.hbm_to_vmem [thread:$0]  %s0, 256, %s17, [#allocation3], 128, 128, 8
    $region5: #{tpu_custom_call.1} parent=1 // pred_fallthru
      _
    // Predicated region
    $region6: #{tpu_custom_call.1} parent=1 // pred_check
      _
    $region7: #{tpu_custom_call.1} parent=1 // pred_check_branch
      %24 = sbr.rel (0) target = $region9
    $region8: #{tpu_custom_call.1} parent=1 // pred_region
      %s26 = ssub.s32 512, 512
      %27 = vsyncadd [#allocation6], %s26
      %s28 = sshll.u32 [#allocation5], 4
      %s29 = int_to_ptr.vmem [resolvable:$true] %s28
      %34 = dma.hbm_to_vmem [thread:$0]  %s1, 512, %s29, [#allocation6], 128, 128, 8
    $region9: #{tpu_custom_call.1} parent=1 // pred_fallthru
      _
    // Predicated region
    $region10: #{tpu_custom_call.1} parent=1 // pred_check
      _
    $region11: #{tpu_custom_call.1} parent=1 // pred_check_branch
      %36 = sbr.rel (0) target = $region13
    $region12: #{tpu_custom_call.1} parent=1 // pred_region
      _
    $region13: #{tpu_custom_call.1} parent=1 // pred_fallthru
      _
    // Predicated region
    $region14: #{tpu_custom_call.1} parent=1 // pred_check
      _
    $region15: #{tpu_custom_call.1} parent=1 // pred_check_branch
      %38 = sbr.rel (0) target = $region17
    $region16: #{tpu_custom_call.1} parent=1 // pred_region
      %39 = dma.done [#allocation3], 256
    $region17: #{tpu_custom_call.1} parent=1 // pred_fallthru
      _
    // Predicated region
    $region18: #{tpu_custom_call.1} parent=1 // pred_check
      _
    $region19: #{tpu_custom_call.1} parent=1 // pred_check_branch
      %41 = sbr.rel (0) target = $region21
    $region20: #{tpu_custom_call.1} parent=1 // pred_region
      %42 = dma.done [#allocation6], 512
    $region21: #{tpu_custom_call.1} parent=1 // pred_fallthru
      _
    %v43 = vld [vmem:[#allocation2] sm:$0xff]
    %v44 = vld [vmem:[#allocation2 + $0x8] sm:$0xff]
    %v45 = vld [vmem:[#allocation5] sm:$0xff]
    %v46 = vld [vmem:[#allocation5 + $0x8] sm:$0xff]
    %v47 = vld [vmem:[#allocation5 + $0x10] sm:$0xff]
    %v48 = vld [vmem:[#allocation5 + $0x18] sm:$0xff]
    %v49 = vld [vmem:[%s2] sm:$0x1]
    %v51 = vlaneseq
    %v52 = vshrl.u32 %v51, 7
    %v53 = vsub.s32 0, %v52
    %v54 = vrot.slane %v49, %v53
    %vm56 = vcmask 261120
    %v58 = vsel %vm56, %v43, 0
    %v61 = vsel %vm56, %v44, 0
    %63 = vmatprep.subr.mxu0 0.0
    %64 = vmatpush1.msra.mxu0 %v45
    %65 = vmatprep.subr.mxu0 0.0
    %66 = vmatpush1.msra.mxu0 %v46
    %67 = vmatprep.subr.mxu0 0.0
    %68 = vmatpush1.msra.mxu0 %v47
    %69 = vmatprep.subr.mxu0 0.0
    %70 = vmatpush1.msra.mxu0 %v48
    %71 = vmatprep.subr.mxu0 0.0
    %72 = vmatpush1.msra.mxu0 0.0
    %73 = vmatprep.subr.mxu0 0.0
    %74 = vmatpush1.msra.mxu0 0.0
    %75 = vmatprep.subr.mxu0 0.0
    %76 = vmatpush1.msra.mxu0 0.0
    %77 = vmatprep.subr.mxu0 0.0
    %78 = vmatpush1.msra.mxu0 0.0
    %79 = vmatprep.subr.mxu0 0.0
    %80 = vmatpush1.msra.mxu0 0.0
    %81 = vmatprep.subr.mxu0 0.0
    %82 = vmatpush1.msra.mxu0 0.0
    %83 = vmatprep.subr.mxu0 0.0
    %84 = vmatpush1.msra.mxu0 0.0
    %85 = vmatprep.subr.mxu0 0.0
    %86 = vmatpush1.msra.mxu0 0.0
    %87 = vmatprep.subr.mxu0 0.0
    %88 = vmatpush1.msra.mxu0 0.0
    %89 = vmatprep.subr.mxu0 0.0
    %90 = vmatpush1.msra.mxu0 0.0
    %91 = vmatprep.subr.mxu0 0.0
    %92 = vmatpush1.msra.mxu0 0.0
    %93 = vmatprep.subr.mxu0 0.0
    %94 = vmatpush1.msra.mxu0 0.0
    %95 = vmatprep.subr.mxu0 0.0
    %96 = vmatpush1.msra.mxu0 0.0
    %97 = vmatprep.subr.mxu0 0.0
    %98 = vmatpush1.msra.mxu0 0.0
    %99 = vmatprep.subr.mxu0 0.0
    %100 = vmatpush1.msra.mxu0 0.0
    %101 = vmatprep.subr.mxu0 0.0
    %102 = vmatpush1.msra.mxu0 0.0
    %103 = vmatprep.subr.mxu0 0.0
    %104 = vmatpush1.msra.mxu0 0.0
    %105 = vmatprep.subr.mxu0 0.0
    %106 = vmatpush1.msra.mxu0 0.0
    %107 = vmatprep.subr.mxu0 0.0
    %108 = vmatpush1.msra.mxu0 0.0
    %109 = vmatprep.subr.mxu0 0.0
    %110 = vmatpush1.msra.mxu0 0.0
    %111 = vmatprep.subr.mxu0 0.0
    %112 = vmatpush1.msra.mxu0 0.0
    %113 = vmatprep.subr.mxu0 0.0
    %114 = vmatpush1.msra.mxu0 0.0
    %115 = vmatprep.subr.mxu0 0.0
    %116 = vmatpush1.msra.mxu0 0.0
    %117 = vmatprep.subr.mxu0 0.0
    %118 = vmatpush1.msra.mxu0 0.0
    %119 = vmatprep.subr.mxu0 0.0
    %120 = vmatpush1.msra.mxu0 0.0
    %121 = vmatprep.subr.mxu0 0.0
    %122 = vmatpush1.msra.mxu0 0.0
    %123 = vmatprep.subr.mxu0 0.0
    %124 = vmatpush1.msra.mxu0 0.0
    %125 = vmatprep.subr.mxu0 0.0
    %126 = vmatpush1.msra.mxu0 0.0
    %127 = vmatprep.mubr.f32.mxu0 0.0
    %128 = vmatmul.mubr.f32.gmra.mrb[0].mxu0 %v58
    %v129 = vpop.f32.mrb[0].mxu0
    %v130 = vadd.f32 %v54, %v129
    %v131 = vpop.f32.mrb[0].mxu0
    %132 = vmatprep.mubr.f32.mxu0 0.0
    %133 = vmatmul.mubr.f32.gmra.mrb[0].mxu0 %v61
    %v134 = vpop.f32.mrb[0].mxu0
    %v135 = vadd.f32 %v54, %v134
    %v136 = vpop.f32.mrb[0].mxu0
    %137 = vdwg.mxu0
    %v138 = vmul.f32 %v130, 0.70710677
    %v139 = vmul.f32 %v135, 0.70710677
    %v140 = verf.f32.pop %v138
    %v141 = verf.f32.pop %v139
    %v142 = vadd.f32 %v140, 1.0
    %v143 = vadd.f32 %v141, 1.0
    %v144 = vmul.f32 %v142, 0.5
    %v145 = vmul.f32 %v143, 0.5
    %v146 = vmul.f32 %v130, %v144
    %v147 = vmul.f32 %v135, %v145
    %148 = vst [vmem:[#allocation7] sm:$0xff] %v146
    %149 = vst [vmem:[#allocation7 + $0x8] sm:$0xff] %v147
    // Predicated region
    $region22: #{tpu_custom_call.1} parent=1 // pred_check
      _
    $region23: #{tpu_custom_call.1} parent=1 // pred_check_branch
      %151 = sbr.rel (0) target = $region25
    $region24: #{tpu_custom_call.1} parent=1 // pred_region
      %s153 = ssub.s32 256, 256
      %154 = vsyncadd [#allocation4], %s153
      %s155 = sshll.u32 [#allocation7], 4
      %s156 = int_to_ptr.vmem [resolvable:$true] %s155
      %161 = dma.vmem_to_hbm [thread:$0]  %s156, 256, %s3, [#allocation4], 128, 128, 8
    $region25: #{tpu_custom_call.1} parent=1 // pred_fallthru
      _
    // Predicated region
    $region26: #{tpu_custom_call.1} parent=1 // pred_check
      _
    $region27: #{tpu_custom_call.1} parent=1 // pred_check_branch
      %163 = sbr.rel (0) target = $region29
    $region28: #{tpu_custom_call.1} parent=1 // pred_region
      %164 = dma.done [#allocation4], 256
    $region29: #{tpu_custom_call.1} parent=1 // pred_fallthru
      _
    %165 = vsyncpa [#allocation3], 1
    %166 = vsyncpa [#allocation6], 1
    %167 = vsyncpa [#allocation4], 1

</llo_original>
